<compile_context>
chip_gen: v5e
topology: v5e:2x2
jax: 0.10.0
libtpu: 0.0.40
codegen_flags: <defaults>
</compile_context>

<pallas_src>
import functools

import jax
import jax.numpy as jnp
from jax import lax
from jax.experimental import pallas as pl
from jax.experimental.pallas import tpu as pltpu


# ----------------------------------------------------------------------------
# One-time probe: pin down pltpu.roll's rotation direction so the in-kernel
# tap shifts are robust across JAX/Mosaic versions.
# ----------------------------------------------------------------------------
@functools.lru_cache(maxsize=None)
def _roll_matches_numpy() -> bool:
    """True iff pltpu.roll(x, s, axis)[..., i] == x[..., i - s] (np.roll)."""
    def k(x_ref, o_ref):
        o_ref[...] = pltpu.roll(x_ref[...], shift=1, axis=1)

    x = jnp.broadcast_to(jnp.arange(128, dtype=jnp.float32)[None, :], (8, 128))
    y = pl.pallas_call(k, out_shape=jax.ShapeDtypeStruct((8, 128), jnp.float32))(x)
    return float(y[0, 1]) == 0.0


# ----------------------------------------------------------------------------
# Pallas kernel: one timestep of Conv2d(3x3,s1,p1) -> BN -> MaxPool2d(2) ->
# BetaLIF for one chunk of pooled spatial rows.  Membrane carried in VMEM
# scratch across the (inner, "arbitrary") time grid axis.
# ----------------------------------------------------------------------------
def _snn_step_kernel(x_ref, w_ref, b_ref, mask_ref, spk_ref, pot_ref, mem_ref,
                     *, Wo, threshold, init_beta, roll_numpy):
    # x_ref    : (1, 4, Cin, nc) bf16  raw spikes; group g=(r,s) pool position,
    #                                  lane m = (b_local*Ho + i)*Wo + j
    # w_ref    : (9, Cout, Cin)  f32   conv weight (BN scale folded), tap-major
    # b_ref    : (Cout, 1)       f32   folded conv-bias + BN shift
    # mask_ref : (4, 1, nc)      f32   [i>=1, i<=Ho-2, j>=1, j<=Wo-2] 0/1 masks
    # spk_ref  : (1, Cout, nc)   bf16  spikes at this timestep
    # pot_ref  : (1, Cout, nc)   bf16  membrane potential (post-reset)
    # mem_ref  : (Cout, nc)      f32   VMEM scratch, carried across timesteps
    t = pl.program_id(1)

    @pl.when(t == 0)
    def _init():
        mem_ref[...] = jnp.zeros_like(mem_ref)

    nc = x_ref.shape[3]
    cout = mem_ref.shape[0]

    x4 = x_ref[0].astype(jnp.float32)          # (4, Cin, nc)
    w_all = w_ref[...]                         # (9, Cout, Cin)

    # 16 distinct shifted/masked source tiles (built lazily, reused across the
    # 4 pool positions x 9 taps = 36 references).
    tiles = {}

    def tap_tile(ri, si, di, dj):
        key = (ri, si, di, dj)
        if key in tiles:
            return tiles[key]
        src = x4[2 * ri + si]                  # (Cin, nc)
        delta = di * Wo + dj                   # want out[m] = src[m + delta]
        if delta != 0:
            shift = (-delta) % nc if roll_numpy else delta % nc
            src = pltpu.roll(src, shift=shift, axis=1)
        m = None
        if di == -1:
            m = mask_ref[0]
        elif di == 1:
            m = mask_ref[1]
        if dj == -1:
            m = mask_ref[2] if m is None else m * mask_ref[2]
        elif dj == 1:
            m = mask_ref[3] if m is None else m * mask_ref[3]
        if m is not None:
            src = src * m                      # (1, nc) broadcasts over Cin
        tiles[key] = src
        return src

    # Conv (9 taps) accumulated per pool position, then the 2x2 max-pool.
    pooled = None
    for r in range(2):
        for s in range(2):
            acc = jnp.zeros((cout, nc), jnp.float32)
            for dy in range(3):
                for dx in range(3):
                    vi, vj = r + dy - 1, s + dx - 1
                    xt = tap_tile(vi % 2, vj % 2, vi // 2, vj // 2)
                    acc = acc + jnp.dot(w_all[dy * 3 + dx], xt,
                                        preferred_element_type=jnp.float32)
            pooled = acc if pooled is None else jnp.maximum(pooled, acc)

    # Per-channel bias commutes with max -> add once, after the pool.
    cur = pooled + b_ref[...]

    # BetaLIF: mem = beta*mem + I ; spike = H(mem - thr) ; subtract reset.
    mem = init_beta * mem_ref[...] + cur
    spike = mem > threshold
    mem = jnp.where(spike, mem - threshold, mem)
    mem_ref[...] = mem
    spk_ref[0] = jnp.where(spike, 1.0, 0.0).astype(spk_ref.dtype)
    pot_ref[0] = mem.astype(pot_ref.dtype)     # potential returned post-reset


# ----------------------------------------------------------------------------
# JAX glue: layout builders, parameter folding, pallas_call wrapper.
# ----------------------------------------------------------------------------
def _choose_chunking(B, Ho, Wo):
    """Chunks hold whole images so in-kernel lane shifts never need a halo.
    Returns (n_chunks, nc, n_real) with nc a multiple of 128."""
    n_img = Ho * Wo
    for ipc in range(1, B + 1):                       # images per chunk
        if B % ipc == 0 and (ipc * n_img) % 128 == 0:
            return B // ipc, ipc * n_img, ipc * n_img
    nc = ((B * n_img + 127) // 128) * 128             # single padded chunk
    return 1, nc, B * n_img


def _build_inputs(spike, n_chunks, nc, n_real):
    """(T,B,Cin,H,W) f32 -> (T, 4, Cin, n_chunks*nc) bf16, pool-position major:
    group g = r*2+s holds xin[b, ci, 2i+r, 2j+s] at lane (b_local*Ho+i)*Wo+j."""
    T, B, Cin, H, W = spike.shape
    Ho, Wo = H // 2, W // 2
    x = spike.reshape(T, B, Cin, Ho, 2, Wo, 2)
    x = jnp.transpose(x, (0, 4, 6, 2, 1, 3, 5))       # (T, r, s, Cin, B, Ho, Wo)
    x = x.reshape(T, 4, Cin, n_chunks, n_real)
    if n_real != nc:
        x = jnp.pad(x, ((0, 0), (0, 0), (0, 0), (0, 0), (0, nc - n_real)))
    return x.reshape(T, 4, Cin, n_chunks * nc).astype(jnp.bfloat16)


def _build_masks(nc, Ho, Wo):
    """(4, 1, nc) f32 boundary masks for the conv's zero padding."""
    lane = jnp.arange(nc)
    i_idx = (lane // Wo) % Ho
    j_idx = lane % Wo
    masks = jnp.stack([i_idx >= 1, i_idx <= Ho - 2,
                       j_idx >= 1, j_idx <= Wo - 2], axis=0)
    return masks.astype(jnp.float32).reshape(4, 1, nc)


def _fold_params(w_oihw, conv_b, gamma, beta_bn, r_mean, r_var, eps=1e-5):
    """Fold conv bias + inference BatchNorm; weights laid out tap-major."""
    Cout, Cin = w_oihw.shape[0], w_oihw.shape[1]
    scale = gamma / jnp.sqrt(r_var + eps)                      # (Cout,)
    w_eff = w_oihw * scale[:, None, None, None]                # (Cout,Cin,3,3)
    w_taps = jnp.transpose(w_eff, (2, 3, 0, 1)).reshape(9, Cout, Cin)
    bias = (conv_b - r_mean) * scale + beta_bn
    return w_taps.astype(jnp.float32), bias.reshape(Cout, 1).astype(jnp.float32)


@functools.partial(jax.jit,
                   static_argnames=("threshold", "init_beta", "roll_numpy"))
def _beta_csnn_forward_impl(spike, w_taps, bias, *, threshold, init_beta,
                            roll_numpy):
    T, B, Cin, H, W = spike.shape
    Cout = w_taps.shape[1]
    Ho, Wo = H // 2, W // 2
    n_chunks, nc, n_real = _choose_chunking(B, Ho, Wo)
    N = n_chunks * nc

    x = _build_inputs(spike, n_chunks, nc, n_real)      # (T, 4, Cin, N) bf16
    masks = _build_masks(nc, Ho, Wo)                    # (4, 1, nc) f32

    kernel = functools.partial(_snn_step_kernel, Wo=Wo,
                               threshold=float(threshold),
                               init_beta=float(init_beta),
                               roll_numpy=roll_numpy)

    grid_spec = pltpu.PrefetchScalarGridSpec(
        num_scalar_prefetch=0,
        grid=(n_chunks, T),                             # chunks x timesteps
        in_specs=[
            pl.BlockSpec((1, 4, Cin, nc), lambda c, t: (t, 0, 0, c)),
            pl.BlockSpec((9, Cout, Cin), lambda c, t: (0, 0, 0)),
            pl.BlockSpec((Cout, 1), lambda c, t: (0, 0)),
            pl.BlockSpec((4, 1, nc), lambda c, t: (0, 0, 0)),
        ],
        out_specs=[
            pl.BlockSpec((1, Cout, nc), lambda c, t: (t, 0, c)),
            pl.BlockSpec((1, Cout, nc), lambda c, t: (t, 0, c)),
        ],
        scratch_shapes=[pltpu.VMEM((Cout, nc), jnp.float32)],
    )

    cost = pl.CostEstimate(
        flops=2 * T * Cout * (4 * B * Ho * Wo) * (9 * Cin),
        transcendentals=0,
        bytes_accessed=int(x.size * 2 + w_taps.size * 4 + bias.size * 4
                           + masks.size * 4 + 2 * T * Cout * N * 2))

    spk, pot = pl.pallas_call(
        kernel,
        out_shape=(jax.ShapeDtypeStruct((T, Cout, N), jnp.bfloat16),
                   jax.ShapeDtypeStruct((T, Cout, N), jnp.bfloat16)),
        grid_spec=grid_spec,
        compiler_params=pltpu.CompilerParams(
            dimension_semantics=("parallel", "arbitrary"),
            vmem_limit_bytes=32 * 1024 * 1024),
        cost_estimate=cost,
    )(x, w_taps, bias, masks)

    def to_nchw(a):                        # (T,Cout,N) -> (T,B,Cout,Ho,Wo) f32
        a = a.reshape(T, Cout, n_chunks, nc)[..., :n_real]
        a = a.reshape(T, Cout, B, Ho, Wo)
        return jnp.transpose(a, (0, 2, 1, 3, 4)).astype(jnp.float32)

    return to_nchw(spk), to_nchw(pot)


def beta_csnn_forward(spike_nchw, w_oihw, conv_b, gamma, beta_bn, r_mean, r_var,
                      *, threshold=1.0, init_beta=0.5):
    """BetaCSNN.forward(spike, is_train_beta=False) hot path (Beta-LIF stage).
    spike_nchw: (T, B, Cin, H, W) f32 -> (out_spikes, out_potentials),
    each (T, B, Cout, H//2, W//2) f32 (PyTorch NCHW convention)."""
    w_taps, bias = _fold_params(w_oihw, conv_b, gamma, beta_bn, r_mean, r_var)
    return _beta_csnn_forward_impl(spike_nchw, w_taps, bias,
                                   threshold=float(threshold),
                                   init_beta=float(init_beta),
                                   roll_numpy=_roll_matches_numpy())


# ----------------------------------------------------------------------------
# Pure-JAX reference for the sanity check.
# ----------------------------------------------------------------------------
def _lif_scan(pooled, threshold, init_beta):
    def step(mem, cur):
        mem = init_beta * mem + cur
        spk = (mem > threshold).astype(jnp.float32)
        mem = mem - spk * threshold
        return mem, (spk, mem)

    _, (spks, pots) = lax.scan(step, jnp.zeros_like(pooled[0]), pooled)
    return spks, pots


def reference_forward(spike_nchw, w_oihw, conv_b, gamma, beta_bn, r_mean, r_var,
                      threshold=1.0, init_beta=0.5, eps=1e-5):
    def conv_bn_pool(xt):
        y = lax.conv_general_dilated(
            xt, w_oihw, window_strides=(1, 1), padding=((1, 1), (1, 1)),
            dimension_numbers=("NCHW", "OIHW", "NCHW"),
            precision=lax.Precision.HIGHEST)
        y = y + conv_b[None, :, None, None]
        y = ((y - r_mean[None, :, None, None])
             * (gamma[None, :, None, None]
                / jnp.sqrt(r_var[None, :, None, None] + eps))
             + beta_bn[None, :, None, None])
        return lax.reduce_window(y, -jnp.inf, lax.max,
                                 (1, 1, 2, 2), (1, 1, 2, 2), "VALID")

    pooled = jax.vmap(conv_bn_pool)(spike_nchw)           # (T,B,Cout,Ho,Wo)
    return _lif_scan(pooled, threshold, init_beta)


if __name__ == "__main__":
    T, B, Cin, H, W, Cout = 8, 2, 4, 16, 16, 8

    key = jax.random.PRNGKey(0)
    ks = jax.random.split(key, 7)
    # Deterministic synthetic parameters (shapes from the module's __init__).
    w_oihw = jax.random.normal(ks[0], (Cout, Cin, 3, 3), jnp.float32) / jnp.sqrt(9.0 * Cin)
    conv_b = 0.1 * jax.random.normal(ks[1], (Cout,), jnp.float32)
    gamma = 1.0 + 0.1 * jax.random.normal(ks[2], (Cout,), jnp.float32)
    beta_bn = 0.1 * jax.random.normal(ks[3], (Cout,), jnp.float32)
    r_mean = 0.1 * jax.random.normal(ks[4], (Cout,), jnp.float32)
    r_var = 1.0 + 0.5 * jax.random.uniform(ks[5], (Cout,), jnp.float32)
    spike_in = (jax.random.uniform(ks[6], (T, B, Cin, H, W)) < 0.3).astype(jnp.float32)

    out_spikes, out_pots = beta_csnn_forward(
        spike_in, w_oihw, conv_b, gamma, beta_bn, r_mean, r_var,
        threshold=1.0, init_beta=0.5)
    jax.block_until_ready((out_spikes, out_pots))

    assert out_spikes.shape == (T, B, Cout, H // 2, W // 2)
    assert out_pots.shape == (T, B, Cout, H // 2, W // 2)

    # Check against a full-f32 reference.  Expected deviations: bf16 rounding
    # of the stored potentials (<~0.03 abs) and rare near-threshold spike
    # flips from accumulation-order / MXU-pass differences.
    ref_spk, ref_pot = reference_forward(
        spike_in, w_oihw, conv_b, gamma, beta_bn, r_mean, r_var,
        threshold=1.0, init_beta=0.5)
    spk_flip_frac = float(jnp.mean(jnp.abs(out_spikes - ref_spk)))
    pot_bad_frac = float(jnp.mean(
        (jnp.abs(out_pots - ref_pot) > 6e-2).astype(jnp.float32)))
    assert spk_flip_frac < 5e-2, f"spike mismatch fraction {spk_flip_frac}"
    assert pot_bad_frac < 5e-2, f"potential mismatch fraction {pot_bad_frac}"

    print("KERNEL_OK")
</pallas_src>

<mosaic_0001>
module attributes {stable_mosaic.version = 11 : i64} {
  func.func @k(%arg0: memref<8x128xf32, #tpu.memory_space<vmem>>, %arg1: memref<8x128xf32, #tpu.memory_space<vmem>>) attributes {dimension_semantics = [], scalar_prefetch = 0 : i64, scratch_operands = 0 : i64, tpu.core_type = #tpu.core_type<tc>} {
    %c0 = arith.constant 0 : index
    %c0_0 = arith.constant 0 : index
    %0 = vector.load %arg0[%c0, %c0_0] : memref<8x128xf32, #tpu.memory_space<vmem>>, vector<8x128xf32>
    %c1_i32 = arith.constant 1 : i32
    %1 = tpu.dynamic_rotate %0 by %c1_i32 dim 1 : vector<8x128xf32>, i32 -> vector<8x128xf32>
    %c0_1 = arith.constant 0 : index
    %c0_2 = arith.constant 0 : index
    %2 = vector.load %arg1[%c0_1, %c0_2] : memref<8x128xf32, #tpu.memory_space<vmem>>, vector<8x128xf32>
    tpu.vector_store %arg1[%c0_1, %c0_2], %1 {strides = array<i32>} : memref<8x128xf32, #tpu.memory_space<vmem>>, vector<8x128xf32>,
    return
  }
}

</mosaic_0001>

<llo_original>
// kernel: tpu_custom_call.1
$region0: #{tpu_custom_call.1}
  #allocation0 [shape = 'u32[]', space=smem, size = 0x4, offset = 0x4, fixed_abs, tag = 'smem constant byte address 0x4 - core index']
  #allocation1 [shape = 'u32[72,128]{1,0:T(1,128)}', space=vmem, size = 0x9000, scoped, tag = 'internal scratch']
  %s0 = inlined_call_operand.hbm [shape: f32[8,128], index: 0, kind: input, shape index: {}]
  %s1 = inlined_call_operand.hbm [shape: f32[8,128], index: 1, kind: output, shape index: {}]
  %s2 = sld [smem:[#allocation0]]
  $region18: #{tpu_custom_call.1} parent=0
    _
  %s4 = ssub.s32 1, %s2
  %s5 = scalar_select 0, %s4, %s2
  $region1: #{tpu_custom_call.1} parent=0
    #allocation2 [shape = 'u8[4096]{0}', space=vmem, size = 0x1000, scoped, tag = 'input window, operand 0, single buffered']
    #allocation3 [shape = 's32[1]{0}', space=sflag, size = 0x4, scoped, tag = 'scoped memory for tpu_custom_call.1']
    #allocation4 [shape = 's32[1]{0}', space=sflag, size = 0x4, scoped, tag = 'scoped memory for tpu_custom_call.1']
    #allocation5 [shape = 'u8[4096]{0}', space=vmem, size = 0x1000, scoped, tag = 'output window, operand 0, single buffered']
    %6 = vsyncpa [#allocation3], 0
    %7 = vsyncpa [#allocation4], 0
    // Predicated region
    $region2: #{tpu_custom_call.1} parent=1 // pred_check
      _
    $region3: #{tpu_custom_call.1} parent=1 // pred_check_branch
      %9 = sbr.rel (0) target = $region5
    $region4: #{tpu_custom_call.1} parent=1 // pred_region
      %11 = vsyncadd [#allocation3], 0
      %s13 = sshll.u32 %s0, 4
      %s14 = int_to_ptr.hbm [resolvable:$true] %s13
      %s15 = sshll.u32 [#allocation2], 4
      %s16 = int_to_ptr.vmem [resolvable:$true] %s15
      %18 = dma.hbm_to_vmem [thread:$0]  %s14, 128, %s16, [#allocation3]
    $region5: #{tpu_custom_call.1} parent=1 // pred_fallthru
      _
    // Predicated region
    $region6: #{tpu_custom_call.1} parent=1 // pred_check
      _
    $region7: #{tpu_custom_call.1} parent=1 // pred_check_branch
      %20 = sbr.rel (0) target = $region9
    $region8: #{tpu_custom_call.1} parent=1 // pred_region
      %22 = dma.done [#allocation3], 128
    $region9: #{tpu_custom_call.1} parent=1 // pred_fallthru
      _
    %v23 = vld [vmem:[#allocation2] sm:$0xff]
    %24 = vrot.lane.b32.xlu0 %v23, 1
    %v25 = vpop.permute.xlu0 %24
    %26 = vst [vmem:[#allocation5] sm:$0xff] %v25
    // Predicated region
    $region10: #{tpu_custom_call.1} parent=1 // pred_check
      _
    $region11: #{tpu_custom_call.1} parent=1 // pred_check_branch
      %28 = sbr.rel (0) target = $region13
    $region12: #{tpu_custom_call.1} parent=1 // pred_region
      %30 = vsyncadd [#allocation4], 0
      %s32 = sshll.u32 [#allocation5], 4
      %s33 = int_to_ptr.vmem [resolvable:$true] %s32
      %s34 = sshll.u32 %s1, 4
      %s35 = int_to_ptr.hbm [resolvable:$true] %s34
      %37 = dma.vmem_to_hbm [thread:$0]  %s33, 128, %s35, [#allocation4]
    $region13: #{tpu_custom_call.1} parent=1 // pred_fallthru
      _
    // Predicated region
    $region14: #{tpu_custom_call.1} parent=1 // pred_check
      _
    $region15: #{tpu_custom_call.1} parent=1 // pred_check_branch
      %39 = sbr.rel (0) target = $region17
    $region16: #{tpu_custom_call.1} parent=1 // pred_region
      %41 = dma.done [#allocation4], 128
    $region17: #{tpu_custom_call.1} parent=1 // pred_fallthru
      _
    %42 = vsyncpa [#allocation3], 1
    %43 = vsyncpa [#allocation4], 1

</llo_original>
